<compile_context>
chip_gen: v5e
topology: v5e:2x2
jax: 0.10.0
libtpu: 0.0.40
codegen_flags: <defaults>
</compile_context>

<pallas_src>
import functools
import warnings

import jax
import jax.numpy as jnp
from jax.experimental import pallas as pl
from jax.experimental.pallas import tpu as pltpu


def _coupling_kernel(x_ref, p_ref, out_ref, ld_ref, *, H, W, NB):
    """One grid step, NB batch elements folded along the lane axis.

    x_ref  : (NB, 2, Ch, HW)   input; [:, 0] = x0 half, [:, 1] = x1 half
    p_ref  : (12, Ch, Ch)      packed parameters (see pack_params)
    out_ref: (NB, 1, Ch, HW)   x1 half of the (input-aliased) output
    ld_ref : (NB, 1, 1)        per-batch log-determinant
    """
    Ch = x_ref.shape[2]
    HW = x_ref.shape[3]
    L = NB * HW

    # Load x0 / x1, folding batch along lanes.  Offsets are multiples of HW
    # (itself a multiple of 128 here) -> pure vreg placement, no shuffles.
    if NB == 1:
        x0 = x_ref[0, 0]
        x1 = x_ref[0, 1]
    else:
        x0 = jnp.concatenate([x_ref[b, 0] for b in range(NB)], axis=1)
        x1 = jnp.concatenate([x_ref[b, 1] for b in range(NB)], axis=1)

    # Per-pixel row / column inside the image.  The batch seam coincides with
    # an image border, so the same masks implement the conv's zero padding AND
    # keep taps from leaking between folded batch elements.
    idx = jax.lax.broadcasted_iota(jnp.int32, (Ch, L), 1)
    if (W & (W - 1)) == 0 and (H & (H - 1)) == 0:      # power-of-two fast path
        col = idx & (W - 1)
        row = (idx >> (W.bit_length() - 1)) & (H - 1)
    else:
        col = idx % W
        row = (idx // W) % H
    row_ok = {-1: row > 0, 0: None, 1: row < H - 1}
    col_ok = {-1: col > 0, 0: None, 1: col < W - 1}

    # 3x3 "same" conv: 9 shifted taps (XLU rolls, kept in vregs) x 9 small MXU
    # dots accumulated in f32.  No im2col buffer, no halo scratch.
    h = None
    t = 0
    for dy in (-1, 0, 1):
        for dx in (-1, 0, 1):
            shift = (-(dy * W + dx)) % L
            tap = pltpu.roll(x0, shift, axis=1) if shift else x0
            m = row_ok[dy]
            if col_ok[dx] is not None:
                m = col_ok[dx] if m is None else jnp.logical_and(m, col_ok[dx])
            if m is not None:
                tap = jnp.where(m, tap, 0.0)
            d = jnp.dot(p_ref[t], tap, preferred_element_type=jnp.float32)
            h = d if h is None else h + d
            t += 1

    b1 = p_ref[11, :, 0:1]          # (Ch, 1)
    b2_mu = p_ref[11, :, 1:2]
    b2_ls = p_ref[11, :, 2:3]
    h = jnp.maximum(h + b1, 0.0)    # ReLU

    # 1x1 conv, split into the mu / log_std heads (avoids a sublane-offset
    # slice of a (2*Ch, L) result).
    mu = jnp.dot(p_ref[9], h, preferred_element_type=jnp.float32) + b2_mu
    log_std = 1.4 * jnp.tanh(
        jnp.dot(p_ref[10], h, preferred_element_type=jnp.float32) + b2_ls)
    x1_new = mu + x1 * jnp.exp(log_std)

    # Store only the x1 half (the x0 half of the aliased output already holds
    # the input values) and the per-batch log_det.
    inv_ch = 1.0 / Ch
    for b in range(NB):
        out_ref[b, 0] = x1_new[:, b * HW:(b + 1) * HW]
        ld_ref[b] = jnp.broadcast_to(
            jnp.sum(log_std[:, b * HW:(b + 1) * HW]) * inv_ch, (1, 1))


def pack_params(w1_oihw, b1, w2_oihw, b2):
    """One-time parameter re-layout (hoisted out of the per-call path).

    Packed layout, shape (12, Ch, Ch):
      [0:9]  3x3-conv taps: slot ky*3+kx holds W1[:, :, ky, kx]   (out, in)
      [9]    1x1-conv mu head        W2[:Ch, :]
      [10]   1x1-conv log_std head   W2[Ch:, :]
      [11]   bias tile: column 0 = b1, column 1 = b2[:Ch], column 2 = b2[Ch:]
    """
    Ch = w1_oihw.shape[0]
    assert w1_oihw.shape == (Ch, Ch, 3, 3)
    assert Ch >= 3, "bias packing needs at least 3 columns"
    w1_taps = jnp.transpose(w1_oihw, (2, 3, 0, 1)).reshape(9, Ch, Ch)
    w2 = w2_oihw.reshape(2 * Ch, Ch)
    bias = jnp.zeros((Ch, Ch), jnp.float32)
    bias = bias.at[:, 0].set(b1).at[:, 1].set(b2[:Ch]).at[:, 2].set(b2[Ch:])
    return jnp.concatenate(
        [w1_taps, w2[:Ch][None], w2[Ch:][None], bias[None]], axis=0
    ).astype(jnp.float32)


def _single_tensorcore_chip():
    """True on chips with one TensorCore (v5e / v6e): fold batch into lanes."""
    try:
        kind = jax.devices()[0].device_kind.lower()
    except Exception:
        return False
    return any(s in kind for s in ("v5e", "v5 lite", "v6e", "v6 lite"))


def make_affine_coupling_forward(B, C, H, W, *, fold_batch=None):
    """Builds a jitted forward: (x NCHW f32 [donated], packed params) ->
    (x_out NCHW f32, log_det (B,) f32)."""
    assert C % 2 == 0
    Ch = C // 2
    HW = H * W
    if fold_batch is None:
        fold_batch = _single_tensorcore_chip()
    NB = B if fold_batch else 1        # batch elements folded per grid step
    grid = (B // NB,)
    kernel = functools.partial(_coupling_kernel, H=H, W=W, NB=NB)

    def fwd(x_nchw, params):
        xr = x_nchw.reshape(B, 2, Ch, HW)            # free view, stays NCHW
        out, ld = pl.pallas_call(
            kernel,
            out_shape=(
                jax.ShapeDtypeStruct((B, 2, Ch, HW), jnp.float32),
                jax.ShapeDtypeStruct((B, 1, 1), jnp.float32),
            ),
            grid_spec=pltpu.PrefetchScalarGridSpec(
                num_scalar_prefetch=0,
                grid=grid,
                in_specs=[
                    pl.BlockSpec((NB, 2, Ch, HW), lambda b: (b, 0, 0, 0)),
                    pl.BlockSpec((12, Ch, Ch), lambda b: (0, 0, 0)),
                ],
                out_specs=[
                    # Only the x1 half is ever written; the x0 half of the
                    # aliased buffer already holds the input values.
                    pl.BlockSpec((NB, 1, Ch, HW), lambda b: (b, 1, 0, 0)),
                    pl.BlockSpec((NB, 1, 1), lambda b: (b, 0, 0)),
                ],
            ),
            input_output_aliases={0: 0},
            compiler_params=pltpu.CompilerParams(
                dimension_semantics=("parallel",)),
        )(xr, params)
        return out.reshape(B, C, H, W), ld.reshape(B)

    # Donating x lets XLA alias it with the kernel output so the x0 half is
    # never re-written; if donation is not possible XLA silently falls back to
    # a copy and the result stays correct.
    return jax.jit(fwd, donate_argnums=(0,))


def _reference_forward(x, w1_oihw, b1, w2_oihw, b2):
    """Pure-JAX reference matching the PyTorch module (NCHW, OIHW weights)."""
    B, C, H, W = x.shape
    Ch = C // 2
    x0, x1 = x[:, :Ch], x[:, Ch:]
    h = jax.lax.conv_general_dilated(
        x0, w1_oihw, (1, 1), "SAME",
        dimension_numbers=("NCHW", "OIHW", "NCHW")) + b1.reshape(1, Ch, 1, 1)
    h = jnp.maximum(h, 0.0)
    y = jax.lax.conv_general_dilated(
        h, w2_oihw, (1, 1), "SAME",
        dimension_numbers=("NCHW", "OIHW", "NCHW")) + b2.reshape(1, 2 * Ch, 1, 1)
    mu, ls = y[:, :Ch], y[:, Ch:]
    ls = 1.4 * jnp.tanh(ls)
    x1n = mu + x1 * jnp.exp(ls)
    x_out = jnp.concatenate([x0, x1n], axis=1)
    log_det = ls.mean(axis=1).sum(axis=(1, 2))
    return x_out, log_det


if __name__ == "__main__":
    B, d_model, H, W = 2, 8, 16, 16
    Ch = d_model // 2

    key = jax.random.PRNGKey(0)
    kx, k1, kb1, k2, kb2 = jax.random.split(key, 5)

    x = jax.random.normal(kx, (B, d_model, H, W), dtype=jnp.float32)

    # Conv1 (3x3, Ch -> Ch) and Conv2 (1x1, Ch -> 2*Ch), PyTorch OIHW layout.
    bound1 = 1.0 / (Ch * 3 * 3) ** 0.5
    w1 = jax.random.uniform(k1, (Ch, Ch, 3, 3), jnp.float32, -bound1, bound1)
    b1 = jax.random.uniform(kb1, (Ch,), jnp.float32, -bound1, bound1)
    # PyTorch __init__ zeroes conv2; small random values are used instead so
    # the kernel computes something non-trivial (forward semantics unchanged).
    w2 = 0.1 * jax.random.normal(k2, (2 * Ch, Ch, 1, 1), dtype=jnp.float32)
    b2 = 0.1 * jax.random.normal(kb2, (2 * Ch,), dtype=jnp.float32)

    params = pack_params(w1, b1, w2, b2)
    fwd = make_affine_coupling_forward(B, d_model, H, W)

    # Reference is computed BEFORE the kernel call: x is donated to the kernel.
    x_expected, ld_expected = _reference_forward(x, w1, b1, w2, b2)
    jax.block_until_ready((x_expected, ld_expected))

    # Safety net: if XLA cannot alias the donated buffer it falls back to a
    # copy (still correct); suppress the advisory warning in that case.
    warnings.filterwarnings(
        "ignore", message="Some donated buffers were not usable")

    x_out, log_det = fwd(x, params)
    jax.block_until_ready((x_out, log_det))

    assert x_out.shape == (B, d_model, H, W)
    assert log_det.shape == (B,)
    assert jnp.allclose(x_out, x_expected, rtol=1e-4, atol=1e-5), "x mismatch"
    assert jnp.allclose(log_det, ld_expected, rtol=1e-4, atol=1e-4), "log_det mismatch"

    print("KERNEL_OK")
</pallas_src>

<mosaic_0001>
module attributes {stable_mosaic.version = 11 : i64} {
  func.func @_coupling_kernel(%arg0: i32, %arg1: memref<1x2x4x256xf32, #tpu.memory_space<vmem>>, %arg2: memref<12x4x4xf32, #tpu.memory_space<vmem>>, %arg3: memref<1x1x4x256xf32, #tpu.memory_space<vmem>>, %arg4: memref<1x1x1xf32, #tpu.memory_space<vmem>>) attributes {dimension_semantics = [#tpu.dimension_semantics<parallel>], iteration_bounds = array<i64: 2>, scalar_prefetch = 0 : i64, scratch_operands = 0 : i64, tpu.core_type = #tpu.core_type<tc>, window_params = [{transform_indices = @transform_0, window_bounds = array<i64: 1, 2, 4, 256>}, {pipeline_mode = #tpu.pipeline_mode<synchronous>, transform_indices = @transform_1, window_bounds = array<i64: 12, 4, 4>}, {transform_indices = @transform_2, window_bounds = array<i64: 1, 1, 4, 256>}, {transform_indices = @transform_3, window_bounds = array<i64: 1, 1, 1>}]} {
    %c0 = arith.constant 0 : index
    %c0_0 = arith.constant 0 : index
    %c0_1 = arith.constant 0 : index
    %c0_2 = arith.constant 0 : index
    %0 = vector.load %arg1[%c0, %c0_0, %c0_1, %c0_2] : memref<1x2x4x256xf32, #tpu.memory_space<vmem>>, vector<1x1x4x256xf32>
    %1 = vector.shape_cast %0 : vector<1x1x4x256xf32> to vector<4x256xf32>
    %c0_3 = arith.constant 0 : index
    %c1 = arith.constant 1 : index
    %c0_4 = arith.constant 0 : index
    %c0_5 = arith.constant 0 : index
    %2 = vector.load %arg1[%c0_3, %c1, %c0_4, %c0_5] : memref<1x2x4x256xf32, #tpu.memory_space<vmem>>, vector<1x1x4x256xf32>
    %3 = vector.shape_cast %2 : vector<1x1x4x256xf32> to vector<4x256xf32>
    %4 = tpu.iota {dimensions = array<i32: 1>} : vector<4x256xi32>
    %c15_i32 = arith.constant 15 : i32
    %5 = vector.broadcast %c15_i32 : i32 to vector<4x256xi32>
    %6 = arith.andi %4, %5 : vector<4x256xi32>
    %c4_i32 = arith.constant 4 : i32
    %7 = vector.broadcast %c4_i32 : i32 to vector<4x256xi32>
    %8 = arith.shrsi %4, %7 : vector<4x256xi32>
    %c15_i32_6 = arith.constant 15 : i32
    %9 = vector.broadcast %c15_i32_6 : i32 to vector<4x256xi32>
    %10 = arith.andi %8, %9 : vector<4x256xi32>
    %c0_i32 = arith.constant 0 : i32
    %11 = vector.broadcast %c0_i32 : i32 to vector<4x256xi32>
    %12 = arith.cmpi sgt, %10, %11 : vector<4x256xi32>
    %c15_i32_7 = arith.constant 15 : i32
    %13 = vector.broadcast %c15_i32_7 : i32 to vector<4x256xi32>
    %14 = arith.cmpi slt, %10, %13 : vector<4x256xi32>
    %c0_i32_8 = arith.constant 0 : i32
    %15 = vector.broadcast %c0_i32_8 : i32 to vector<4x256xi32>
    %16 = arith.cmpi sgt, %6, %15 : vector<4x256xi32>
    %c15_i32_9 = arith.constant 15 : i32
    %17 = vector.broadcast %c15_i32_9 : i32 to vector<4x256xi32>
    %18 = arith.cmpi slt, %6, %17 : vector<4x256xi32>
    %c17_i32 = arith.constant 17 : i32
    %19 = tpu.dynamic_rotate %1 by %c17_i32 dim 1 : vector<4x256xf32>, i32 -> vector<4x256xf32>
    %20 = arith.andi %12, %16 : vector<4x256xi1>
    %cst = arith.constant 0.000000e+00 : f32
    %21 = vector.broadcast %cst : f32 to vector<4x256xf32>
    %22 = arith.select %20, %19, %21 : vector<4x256xi1>, vector<4x256xf32>
    %c0_10 = arith.constant 0 : index
    %c0_11 = arith.constant 0 : index
    %c0_12 = arith.constant 0 : index
    %23 = vector.load %arg2[%c0_10, %c0_11, %c0_12] : memref<12x4x4xf32, #tpu.memory_space<vmem>>, vector<1x4x4xf32>
    %24 = vector.shape_cast %23 : vector<1x4x4xf32> to vector<4x4xf32>
    %cst_13 = arith.constant dense<0.000000e+00> : vector<4x256xf32>
    %25 = tpu.matmul %24, %22, %cst_13 {dimension_numbers = #tpu.dot_dimension_numbers<[1], [0], [0], [1], [0, 0, 1, 1], [], []>} : vector<4x4xf32>, vector<4x256xf32>, vector<4x256xf32> -> vector<4x256xf32>
    %c16_i32 = arith.constant 16 : i32
    %26 = tpu.dynamic_rotate %1 by %c16_i32 dim 1 : vector<4x256xf32>, i32 -> vector<4x256xf32>
    %cst_14 = arith.constant 0.000000e+00 : f32
    %27 = vector.broadcast %cst_14 : f32 to vector<4x256xf32>
    %28 = arith.select %12, %26, %27 : vector<4x256xi1>, vector<4x256xf32>
    %c1_15 = arith.constant 1 : index
    %c0_16 = arith.constant 0 : index
    %c0_17 = arith.constant 0 : index
    %29 = vector.load %arg2[%c1_15, %c0_16, %c0_17] : memref<12x4x4xf32, #tpu.memory_space<vmem>>, vector<1x4x4xf32>
    %30 = vector.shape_cast %29 : vector<1x4x4xf32> to vector<4x4xf32>
    %cst_18 = arith.constant dense<0.000000e+00> : vector<4x256xf32>
    %31 = tpu.matmul %30, %28, %cst_18 {dimension_numbers = #tpu.dot_dimension_numbers<[1], [0], [0], [1], [0, 0, 1, 1], [], []>} : vector<4x4xf32>, vector<4x256xf32>, vector<4x256xf32> -> vector<4x256xf32>
    %32 = arith.addf %25, %31 : vector<4x256xf32>
    %c15_i32_19 = arith.constant 15 : i32
    %33 = tpu.dynamic_rotate %1 by %c15_i32_19 dim 1 : vector<4x256xf32>, i32 -> vector<4x256xf32>
    %34 = arith.andi %12, %18 : vector<4x256xi1>
    %cst_20 = arith.constant 0.000000e+00 : f32
    %35 = vector.broadcast %cst_20 : f32 to vector<4x256xf32>
    %36 = arith.select %34, %33, %35 : vector<4x256xi1>, vector<4x256xf32>
    %c2 = arith.constant 2 : index
    %c0_21 = arith.constant 0 : index
    %c0_22 = arith.constant 0 : index
    %37 = vector.load %arg2[%c2, %c0_21, %c0_22] : memref<12x4x4xf32, #tpu.memory_space<vmem>>, vector<1x4x4xf32>
    %38 = vector.shape_cast %37 : vector<1x4x4xf32> to vector<4x4xf32>
    %cst_23 = arith.constant dense<0.000000e+00> : vector<4x256xf32>
    %39 = tpu.matmul %38, %36, %cst_23 {dimension_numbers = #tpu.dot_dimension_numbers<[1], [0], [0], [1], [0, 0, 1, 1], [], []>} : vector<4x4xf32>, vector<4x256xf32>, vector<4x256xf32> -> vector<4x256xf32>
    %40 = arith.addf %32, %39 : vector<4x256xf32>
    %c1_i32 = arith.constant 1 : i32
    %41 = tpu.dynamic_rotate %1 by %c1_i32 dim 1 : vector<4x256xf32>, i32 -> vector<4x256xf32>
    %cst_24 = arith.constant 0.000000e+00 : f32
    %42 = vector.broadcast %cst_24 : f32 to vector<4x256xf32>
    %43 = arith.select %16, %41, %42 : vector<4x256xi1>, vector<4x256xf32>
    %c3 = arith.constant 3 : index
    %c0_25 = arith.constant 0 : index
    %c0_26 = arith.constant 0 : index
    %44 = vector.load %arg2[%c3, %c0_25, %c0_26] : memref<12x4x4xf32, #tpu.memory_space<vmem>>, vector<1x4x4xf32>
    %45 = vector.shape_cast %44 : vector<1x4x4xf32> to vector<4x4xf32>
    %cst_27 = arith.constant dense<0.000000e+00> : vector<4x256xf32>
    %46 = tpu.matmul %45, %43, %cst_27 {dimension_numbers = #tpu.dot_dimension_numbers<[1], [0], [0], [1], [0, 0, 1, 1], [], []>} : vector<4x4xf32>, vector<4x256xf32>, vector<4x256xf32> -> vector<4x256xf32>
    %47 = arith.addf %40, %46 : vector<4x256xf32>
    %c4 = arith.constant 4 : index
    %c0_28 = arith.constant 0 : index
    %c0_29 = arith.constant 0 : index
    %48 = vector.load %arg2[%c4, %c0_28, %c0_29] : memref<12x4x4xf32, #tpu.memory_space<vmem>>, vector<1x4x4xf32>
    %49 = vector.shape_cast %48 : vector<1x4x4xf32> to vector<4x4xf32>
    %cst_30 = arith.constant dense<0.000000e+00> : vector<4x256xf32>
    %50 = tpu.matmul %49, %1, %cst_30 {dimension_numbers = #tpu.dot_dimension_numbers<[1], [0], [0], [1], [0, 0, 1, 1], [], []>} : vector<4x4xf32>, vector<4x256xf32>, vector<4x256xf32> -> vector<4x256xf32>
    %51 = arith.addf %47, %50 : vector<4x256xf32>
    %c255_i32 = arith.constant 255 : i32
    %52 = tpu.dynamic_rotate %1 by %c255_i32 dim 1 : vector<4x256xf32>, i32 -> vector<4x256xf32>
    %cst_31 = arith.constant 0.000000e+00 : f32
    %53 = vector.broadcast %cst_31 : f32 to vector<4x256xf32>
    %54 = arith.select %18, %52, %53 : vector<4x256xi1>, vector<4x256xf32>
    %c5 = arith.constant 5 : index
    %c0_32 = arith.constant 0 : index
    %c0_33 = arith.constant 0 : index
    %55 = vector.load %arg2[%c5, %c0_32, %c0_33] : memref<12x4x4xf32, #tpu.memory_space<vmem>>, vector<1x4x4xf32>
    %56 = vector.shape_cast %55 : vector<1x4x4xf32> to vector<4x4xf32>
    %cst_34 = arith.constant dense<0.000000e+00> : vector<4x256xf32>
    %57 = tpu.matmul %56, %54, %cst_34 {dimension_numbers = #tpu.dot_dimension_numbers<[1], [0], [0], [1], [0, 0, 1, 1], [], []>} : vector<4x4xf32>, vector<4x256xf32>, vector<4x256xf32> -> vector<4x256xf32>
    %58 = arith.addf %51, %57 : vector<4x256xf32>
    %c241_i32 = arith.constant 241 : i32
    %59 = tpu.dynamic_rotate %1 by %c241_i32 dim 1 : vector<4x256xf32>, i32 -> vector<4x256xf32>
    %60 = arith.andi %14, %16 : vector<4x256xi1>
    %cst_35 = arith.constant 0.000000e+00 : f32
    %61 = vector.broadcast %cst_35 : f32 to vector<4x256xf32>
    %62 = arith.select %60, %59, %61 : vector<4x256xi1>, vector<4x256xf32>
    %c6 = arith.constant 6 : index
    %c0_36 = arith.constant 0 : index
    %c0_37 = arith.constant 0 : index
    %63 = vector.load %arg2[%c6, %c0_36, %c0_37] : memref<12x4x4xf32, #tpu.memory_space<vmem>>, vector<1x4x4xf32>
    %64 = vector.shape_cast %63 : vector<1x4x4xf32> to vector<4x4xf32>
    %cst_38 = arith.constant dense<0.000000e+00> : vector<4x256xf32>
    %65 = tpu.matmul %64, %62, %cst_38 {dimension_numbers = #tpu.dot_dimension_numbers<[1], [0], [0], [1], [0, 0, 1, 1], [], []>} : vector<4x4xf32>, vector<4x256xf32>, vector<4x256xf32> -> vector<4x256xf32>
    %66 = arith.addf %58, %65 : vector<4x256xf32>
    %c240_i32 = arith.constant 240 : i32
    %67 = tpu.dynamic_rotate %1 by %c240_i32 dim 1 : vector<4x256xf32>, i32 -> vector<4x256xf32>
    %cst_39 = arith.constant 0.000000e+00 : f32
    %68 = vector.broadcast %cst_39 : f32 to vector<4x256xf32>
    %69 = arith.select %14, %67, %68 : vector<4x256xi1>, vector<4x256xf32>
    %c7 = arith.constant 7 : index
    %c0_40 = arith.constant 0 : index
    %c0_41 = arith.constant 0 : index
    %70 = vector.load %arg2[%c7, %c0_40, %c0_41] : memref<12x4x4xf32, #tpu.memory_space<vmem>>, vector<1x4x4xf32>
    %71 = vector.shape_cast %70 : vector<1x4x4xf32> to vector<4x4xf32>
    %cst_42 = arith.constant dense<0.000000e+00> : vector<4x256xf32>
    %72 = tpu.matmul %71, %69, %cst_42 {dimension_numbers = #tpu.dot_dimension_numbers<[1], [0], [0], [1], [0, 0, 1, 1], [], []>} : vector<4x4xf32>, vector<4x256xf32>, vector<4x256xf32> -> vector<4x256xf32>
    %73 = arith.addf %66, %72 : vector<4x256xf32>
    %c239_i32 = arith.constant 239 : i32
    %74 = tpu.dynamic_rotate %1 by %c239_i32 dim 1 : vector<4x256xf32>, i32 -> vector<4x256xf32>
    %75 = arith.andi %14, %18 : vector<4x256xi1>
    %cst_43 = arith.constant 0.000000e+00 : f32
    %76 = vector.broadcast %cst_43 : f32 to vector<4x256xf32>
    %77 = arith.select %75, %74, %76 : vector<4x256xi1>, vector<4x256xf32>
    %c8 = arith.constant 8 : index
    %c0_44 = arith.constant 0 : index
    %c0_45 = arith.constant 0 : index
    %78 = vector.load %arg2[%c8, %c0_44, %c0_45] : memref<12x4x4xf32, #tpu.memory_space<vmem>>, vector<1x4x4xf32>
    %79 = vector.shape_cast %78 : vector<1x4x4xf32> to vector<4x4xf32>
    %cst_46 = arith.constant dense<0.000000e+00> : vector<4x256xf32>
    %80 = tpu.matmul %79, %77, %cst_46 {dimension_numbers = #tpu.dot_dimension_numbers<[1], [0], [0], [1], [0, 0, 1, 1], [], []>} : vector<4x4xf32>, vector<4x256xf32>, vector<4x256xf32> -> vector<4x256xf32>
    %81 = arith.addf %73, %80 : vector<4x256xf32>
    %c11 = arith.constant 11 : index
    %c0_47 = arith.constant 0 : index
    %c0_48 = arith.constant 0 : index
    %82 = vector.load %arg2[%c11, %c0_47, %c0_48] : memref<12x4x4xf32, #tpu.memory_space<vmem>>, vector<1x4x1xf32>
    %83 = vector.shape_cast %82 : vector<1x4x1xf32> to vector<4x1xf32>
    %c11_49 = arith.constant 11 : index
    %c0_50 = arith.constant 0 : index
    %c1_51 = arith.constant 1 : index
    %84 = vector.load %arg2[%c11_49, %c0_50, %c1_51] : memref<12x4x4xf32, #tpu.memory_space<vmem>>, vector<1x4x1xf32>
    %85 = vector.shape_cast %84 : vector<1x4x1xf32> to vector<4x1xf32>
    %c11_52 = arith.constant 11 : index
    %c0_53 = arith.constant 0 : index
    %c2_54 = arith.constant 2 : index
    %86 = vector.load %arg2[%c11_52, %c0_53, %c2_54] : memref<12x4x4xf32, #tpu.memory_space<vmem>>, vector<1x4x1xf32>
    %87 = vector.shape_cast %86 : vector<1x4x1xf32> to vector<4x1xf32>
    %88 = vector.broadcast %83 : vector<4x1xf32> to vector<4x256xf32>
    %89 = arith.addf %81, %88 : vector<4x256xf32>
    %cst_55 = arith.constant 0.000000e+00 : f32
    %90 = vector.broadcast %cst_55 : f32 to vector<4x256xf32>
    %91 = arith.maximumf %89, %90 : vector<4x256xf32>
    %c9 = arith.constant 9 : index
    %c0_56 = arith.constant 0 : index
    %c0_57 = arith.constant 0 : index
    %92 = vector.load %arg2[%c9, %c0_56, %c0_57] : memref<12x4x4xf32, #tpu.memory_space<vmem>>, vector<1x4x4xf32>
    %93 = vector.shape_cast %92 : vector<1x4x4xf32> to vector<4x4xf32>
    %cst_58 = arith.constant dense<0.000000e+00> : vector<4x256xf32>
    %94 = tpu.matmul %93, %91, %cst_58 {dimension_numbers = #tpu.dot_dimension_numbers<[1], [0], [0], [1], [0, 0, 1, 1], [], []>} : vector<4x4xf32>, vector<4x256xf32>, vector<4x256xf32> -> vector<4x256xf32>
    %95 = vector.broadcast %85 : vector<4x1xf32> to vector<4x256xf32>
    %96 = arith.addf %94, %95 : vector<4x256xf32>
    %c10 = arith.constant 10 : index
    %c0_59 = arith.constant 0 : index
    %c0_60 = arith.constant 0 : index
    %97 = vector.load %arg2[%c10, %c0_59, %c0_60] : memref<12x4x4xf32, #tpu.memory_space<vmem>>, vector<1x4x4xf32>
    %98 = vector.shape_cast %97 : vector<1x4x4xf32> to vector<4x4xf32>
    %cst_61 = arith.constant dense<0.000000e+00> : vector<4x256xf32>
    %99 = tpu.matmul %98, %91, %cst_61 {dimension_numbers = #tpu.dot_dimension_numbers<[1], [0], [0], [1], [0, 0, 1, 1], [], []>} : vector<4x4xf32>, vector<4x256xf32>, vector<4x256xf32> -> vector<4x256xf32>
    %100 = vector.broadcast %87 : vector<4x1xf32> to vector<4x256xf32>
    %101 = arith.addf %99, %100 : vector<4x256xf32>
    %102 = math.tanh %101 : vector<4x256xf32>
    %cst_62 = arith.constant 1.400000e+00 : f32
    %103 = vector.broadcast %cst_62 : f32 to vector<4x256xf32>
    %104 = arith.mulf %103, %102 : vector<4x256xf32>
    %105 = math.exp %104 : vector<4x256xf32>
    %106 = arith.mulf %3, %105 : vector<4x256xf32>
    %107 = arith.addf %96, %106 : vector<4x256xf32>
    %c0_63 = arith.constant 0 : index
    %c0_64 = arith.constant 0 : index
    %c0_65 = arith.constant 0 : index
    %c0_66 = arith.constant 0 : index
    %108 = vector.load %arg3[%c0_63, %c0_64, %c0_65, %c0_66] : memref<1x1x4x256xf32, #tpu.memory_space<vmem>>, vector<1x1x4x256xf32>
    %109 = vector.shape_cast %108 : vector<1x1x4x256xf32> to vector<4x256xf32>
    %110 = vector.shape_cast %107 : vector<4x256xf32> to vector<1x1x4x256xf32>
    tpu.vector_store %arg3[%c0_63, %c0_64, %c0_65, %c0_66], %110 {strides = array<i32>} : memref<1x1x4x256xf32, #tpu.memory_space<vmem>>, vector<1x1x4x256xf32>,
    %111 = vector.shape_cast %104 : vector<4x256xf32> to vector<1x4x256xf32>
    %cst_67 = arith.constant dense<0.000000e+00> : vector<1xf32>
    %112 = vector.multi_reduction <add>, %111, %cst_67 [1, 2] : vector<1x4x256xf32> to vector<1xf32>
    %113 = vector.shape_cast %112 : vector<1xf32> to vector<1x1x1xf32>
    %114 = vector.extract %113[0, 0, 0] : f32 from vector<1x1x1xf32>
    %cst_68 = arith.constant 2.500000e-01 : f32
    %115 = arith.mulf %114, %cst_68 : f32
    %116 = vector.broadcast %115 : f32 to vector<1x1xf32>
    %c0_69 = arith.constant 0 : index
    %c0_70 = arith.constant 0 : index
    %c0_71 = arith.constant 0 : index
    %117 = vector.load %arg4[%c0_69, %c0_70, %c0_71] : memref<1x1x1xf32, #tpu.memory_space<vmem>>, vector<1x1x1xf32>
    %118 = vector.shape_cast %117 : vector<1x1x1xf32> to vector<1x1xf32>
    %119 = vector.shape_cast %116 : vector<1x1xf32> to vector<1x1x1xf32>
    tpu.vector_store %arg4[%c0_69, %c0_70, %c0_71], %119 {strides = array<i32>} : memref<1x1x1xf32, #tpu.memory_space<vmem>>, vector<1x1x1xf32>,
    return
  }
  func.func @transform_0(%arg0: i32) -> (i32, i32, i32, i32) {
    %c0_i32 = arith.constant 0 : i32
    %c0_i32_0 = arith.constant 0 : i32
    %c0_i32_1 = arith.constant 0 : i32
    %c0_i32_2 = arith.constant 0 : i32
    return %arg0, %c0_i32, %c0_i32_0, %c0_i32_1 : i32, i32, i32, i32
  }
  func.func @transform_1(%arg0: i32) -> (i32, i32, i32) {
    %c0_i32 = arith.constant 0 : i32
    %c0_i32_0 = arith.constant 0 : i32
    %c0_i32_1 = arith.constant 0 : i32
    %c0_i32_2 = arith.constant 0 : i32
    return %c0_i32, %c0_i32_0, %c0_i32_1 : i32, i32, i32
  }
  func.func @transform_2(%arg0: i32) -> (i32, i32, i32, i32) {
    %c1_i32 = arith.constant 1 : i32
    %c0_i32 = arith.constant 0 : i32
    %c0_i32_0 = arith.constant 0 : i32
    %c0_i32_1 = arith.constant 0 : i32
    return %arg0, %c1_i32, %c0_i32, %c0_i32_0 : i32, i32, i32, i32
  }
  func.func @transform_3(%arg0: i32) -> (i32, i32, i32) {
    %c0_i32 = arith.constant 0 : i32
    %c0_i32_0 = arith.constant 0 : i32
    %c0_i32_1 = arith.constant 0 : i32
    return %arg0, %c0_i32, %c0_i32_0 : i32, i32, i32
  }
}

</mosaic_0001>

<llo_original>
// kernel: fwd.1
$region0: #{fwd.1}
  #allocation0 [shape = 'u32[]', space=smem, size = 0x4, offset = 0x4, fixed_abs, tag = 'smem constant byte address 0x4 - core index']
  #allocation1 [shape = 'u32[72,128]{1,0:T(1,128)}', space=vmem, size = 0x9000, scoped, tag = 'internal scratch']
  %s0 = inlined_call_operand.vmem [shape: f32[2,2,4,256], index: 0, kind: input, shape index: {}, may-alias: {0,2}]
  %s1 = inlined_call_operand.vmem [shape: f32[12,4,4], index: 1, kind: input, shape index: {}]
  %s2 = inlined_call_operand.vmem [shape: f32[2,2,4,256], index: 2, kind: output, shape index: {0}, may-alias: {0,2}]
  %s3 = inlined_call_operand.vmem [shape: f32[2,1,1], index: 3, kind: output, shape index: {1}]
  %4 = xla_tuple %s2, %s3
  %s5 = sld [smem:[#allocation0]]
  $region49: #{fwd.1} parent=0
    _
  %s7 = ssub.s32 1, %s5
  %s8 = scalar_select 0, %s7, %s5
  loop: start=0, step=1, limit=4
  $region2: #{fwd.1} parent=0 // loop_pre_header
    _
  $region3: #{fwd.1} parent=0 // loop_header
    %s10 = sphi 0, %s14
    %p11 = scmp.ge.s32.totalorder %s10, 4
    %s20 = sphi 0, %s22
    %s23 = sphi 0, %s20
    %s24 = sphi 0, %s23
    %s40 = sphi 0, %s24
    %s44 = sphi 0, %s44
    %s46 = sphi 0, %s44
    %s47 = sphi 0, %s46
    %s61 = sphi 0, %s47
    %s67 = sphi 0, %s69
    %s70 = sphi 0, %s67
    %s71 = sphi 0, %s70
    %s87 = sphi 0, %s71
    %s93 = sphi 0, %s95
    %s96 = sphi 0, %s93
    %s97 = sphi 0, %s96
    %s113 = sphi 0, %s97
  $region4: #{fwd.1} parent=0 // loop_header_branch
    %13 = sbr.rel (%p11) target = $region8
  $region5: #{fwd.1} parent=0 // loop_body
    %s15 = ssub.s32 %s10, 1
    %s16 = ssub.s32 %s10, 2
    %s17 = sadd.s32 %s10, 1
    %s18 = ssub.s32 %s10, %s17
    %p19 = scmp.eq.s32.totalorder %s18, 0
    %s21 = sadd.s32 %s20, 1
    %s22 = scalar_select %p19, %s20, %s21
    %p25 = pneg %p19
    %p26 = scmp.eq.s32.totalorder %s10, 1
    %p27 = por %p25, %p26
    %p28 = scmp.ne.s32.totalorder %s20, %s23
    %p29 = scmp.eq.s32.totalorder %s10, 0
    %p30 = por %p28, %p29
    %p31 = scmp.ne.s32.totalorder %s20, %s23
    %p32 = scmp.eq.s32.totalorder %s15, 1
    %p33 = por %p31, %p32
    %p34 = scmp.ne.s32.totalorder %s23, %s24
    %p35 = scmp.eq.s32.totalorder %s15, 0
    %p36 = por %p34, %p35
    %p37 = scmp.ne.s32.totalorder %s23, %s24
    %p38 = scmp.eq.s32.totalorder %s16, 1
    %p39 = por %p37, %p38
    %p41 = scmp.ne.s32.totalorder %s24, %s40
    %p42 = scmp.eq.s32.totalorder %s16, 0
    %p43 = por %p41, %p42
    %s45 = sadd.s32 %s44, 1
    %p48 = scmp.eq.s32.totalorder %s10, 1
    %p49 = scmp.ne.s32.totalorder %s44, %s46
    %p50 = scmp.eq.s32.totalorder %s10, 0
    %p51 = por %p49, %p50
    %p52 = scmp.ne.s32.totalorder %s44, %s46
    %p53 = scmp.eq.s32.totalorder %s15, 1
    %p54 = por %p52, %p53
    %p55 = scmp.ne.s32.totalorder %s46, %s47
    %p56 = scmp.eq.s32.totalorder %s15, 0
    %p57 = por %p55, %p56
    %p58 = scmp.ne.s32.totalorder %s46, %s47
    %p59 = scmp.eq.s32.totalorder %s16, 1
    %p60 = por %p58, %p59
    %p62 = scmp.ne.s32.totalorder %s47, %s61
    %p63 = scmp.eq.s32.totalorder %s16, 0
    %p64 = por %p62, %p63
    %s65 = ssub.s32 %s10, %s17
    %p66 = scmp.eq.s32.totalorder %s65, 0
    %s68 = sadd.s32 %s67, 1
    %s69 = scalar_select %p66, %s67, %s68
    %p72 = pneg %p66
    %p73 = scmp.eq.s32.totalorder %s10, 1
    %p74 = por %p72, %p73
    %p75 = scmp.ne.s32.totalorder %s67, %s70
    %p76 = scmp.eq.s32.totalorder %s10, 0
    %p77 = por %p75, %p76
    %p78 = scmp.ne.s32.totalorder %s67, %s70
    %p79 = scmp.eq.s32.totalorder %s15, 1
    %p80 = por %p78, %p79
    %p81 = scmp.ne.s32.totalorder %s70, %s71
    %p82 = scmp.eq.s32.totalorder %s15, 0
    %p83 = por %p81, %p82
    %p84 = scmp.ne.s32.totalorder %s70, %s71
    %p85 = scmp.eq.s32.totalorder %s16, 1
    %p86 = por %p84, %p85
    %p88 = scmp.ne.s32.totalorder %s71, %s87
    %p89 = scmp.eq.s32.totalorder %s16, 0
    %p90 = por %p88, %p89
    %s91 = ssub.s32 %s10, %s17
    %p92 = scmp.eq.s32.totalorder %s91, 0
    %s94 = sadd.s32 %s93, 1
    %s95 = scalar_select %p92, %s93, %s94
    %p98 = pneg %p92
    %p99 = scmp.eq.s32.totalorder %s10, 1
    %p100 = por %p98, %p99
    %p101 = scmp.ne.s32.totalorder %s93, %s96
    %p102 = scmp.eq.s32.totalorder %s10, 0
    %p103 = por %p101, %p102
    %p104 = scmp.ne.s32.totalorder %s93, %s96
    %p105 = scmp.eq.s32.totalorder %s15, 1
    %p106 = por %p104, %p105
    %p107 = scmp.ne.s32.totalorder %s96, %s97
    %p108 = scmp.eq.s32.totalorder %s15, 0
    %p109 = por %p107, %p108
    %p110 = scmp.ne.s32.totalorder %s96, %s97
    %p111 = scmp.eq.s32.totalorder %s16, 1
    %p112 = por %p110, %p111
    %p114 = scmp.ne.s32.totalorder %s97, %s113
    %p115 = scmp.eq.s32.totalorder %s16, 0
    %p116 = por %p114, %p115
    %p117 = scmp.le.s32.totalorder 1, %s10
    %p118 = scmp.lt.s32.totalorder %s10, 3
    %p119 = pnand %p117, %p118
    %p120 = pneg %p119
    // Predicated region
    $region9: #{fwd.1} parent=5 // pred_check
      _
    $region10: #{fwd.1} parent=5 // pred_check_branch
      %122 = sbr.rel (%p119) target = $region12
    $region11: #{fwd.1} parent=5 // pred_region
      %s123 = ssub.s32 %s10, 1
      // Predicated region
      $region13: #{fwd.1} parent=11 // pred_check
        %p124 = pneg %p57
      $region14: #{fwd.1} parent=11 // pred_check_branch
        %126 = sbr.rel (%p124) target = $region16
      $region15: #{fwd.1} parent=11 // pred_region
        _
      $region16: #{fwd.1} parent=11 // pred_fallthru
        _
    $region12: #{fwd.1} parent=5 // pred_fallthru
      _
    %p127 = scmp.lt.s32.totalorder %s10, 2
    // Predicated region
    $region17: #{fwd.1} parent=5 // pred_check
      %p128 = pneg %p127
    $region18: #{fwd.1} parent=5 // pred_check_branch
      %130 = sbr.rel (%p128) target = $region20
    $region19: #{fwd.1} parent=5 // pred_region
      // Predicated region
      $region21: #{fwd.1} parent=19 // pred_check
        %p131 = pneg %p30
      $region22: #{fwd.1} parent=19 // pred_check_branch
        %133 = sbr.rel (%p131) target = $region24
      $region23: #{fwd.1} parent=19 // pred_region
        %p134 = scmp.lt.s32.totalorder %s10, 1
        %s135 = scalar_select %p134, %s10, 1
        %s136 = smul.addr %s135, 4
        %s137 = smul.addr %s136, 4
        %s138 = scalar_lea.vmem %s0, %s137
      $region24: #{fwd.1} parent=19 // pred_fallthru
        _
    $region20: #{fwd.1} parent=5 // pred_fallthru
      _
    %p139 = scmp.le.s32.totalorder 1, %s10
    %p140 = scmp.lt.s32.totalorder %s10, 3
    %p141 = pnand %p139, %p140
    %p142 = pneg %p141
    // Predicated region
    $region25: #{fwd.1} parent=5 // pred_check
      _
    $region26: #{fwd.1} parent=5 // pred_check_branch
      %144 = sbr.rel (%p141) target = $region28
    $region27: #{fwd.1} parent=5 // pred_region
      %s145 = ssub.s32 %s10, 1
      %p146 = scmp.lt.s32.totalorder %s15, 1
      %s147 = scalar_select %p146, %s15, 1
      %s148 = smul.addr %s147, 4
      %s149 = smul.addr %s148, 4
      %s150 = scalar_lea.vmem %s0, %s149
      %p151 = pneg %p36
      %p152 = pneg %p33
      %p153 = pneg %p57
      %p154 = pneg %p54
      %p155 = pneg %p83
      %p156 = pneg %p80
      %p157 = scmp.lt.s32.totalorder %s15, 1
      %s158 = scalar_select %p157, %s15, 1
      %s159 = smul.addr %s158, 4
      %s160 = sadd.s32 2, %s159
      %s161 = smul.addr %s160, 4
      %s162 = scalar_lea.vmem %s2, %s161
      %p163 = pneg %p109
      %p164 = pneg %p106
      %p165 = scmp.lt.s32.totalorder %s15, 1
      %s166 = scalar_select %p165, %s15, 1
      %s167 = scalar_lea.vmem %s3, %s166
      %p168 = scmp.lt.s32.totalorder %s15, 1
      %s169 = scalar_select %p168, %s15, 1
      %s170 = smul.addr %s169, 4
      %s171 = smul.addr %s170, 4
      %s172 = scalar_lea.vmem %s0, %s171
      %p173 = scmp.lt.s32.totalorder %s15, 1
      %s174 = scalar_select %p173, %s15, 1
      %s175 = smul.addr %s174, 4
      %s176 = sadd.s32 2, %s175
      %s177 = smul.addr %s176, 4
      %s178 = scalar_lea.vmem %s2, %s177
      %p179 = scmp.lt.s32.totalorder %s15, 1
      %s180 = scalar_select %p179, %s15, 1
      %s181 = scalar_lea.vmem %s3, %s180
      %v182 = vld [vmem:[%s172] sm:$0xff]
      %s183 = scalar_lea.vmem %s172, 8
      %v184 = vld [vmem:[%s183] sm:$0xff]
      %v185 = vlaneseq
      %v186 = vand.u32 %v185, 127
      %v187 = vadd.s32 %v186, 128
      %v188 = vand.u32 %v186, 15
      %v189 = vand.u32 %v187, 15
      %v190 = vshra.s32 %v186, 4
      %v191 = vshra.s32 %v187, 4
      %v192 = vand.u32 %v190, 15
      %v193 = vand.u32 %v191, 15
      %vm194 = vcmp.gt.s32.totalorder %v192, 0
      %vm195 = vcmp.gt.s32.totalorder %v193, 0
      %vm196 = vcmp.lt.s32.totalorder %v192, 15
      %vm197 = vcmp.lt.s32.totalorder %v193, 15
      %vm198 = vcmp.gt.s32.totalorder %v188, 0
      %vm199 = vcmp.gt.s32.totalorder %v189, 0
      %vm200 = vcmp.lt.s32.totalorder %v188, 15
      %vm201 = vcmp.lt.s32.totalorder %v189, 15
      %203 = vst [vmem:[#allocation1] ss:$2 sm:$0xff] %v182
      %v204 = vld.sshfl [vmem:[#allocation1] sm:$0xff pattern:$0x75316420]
      %v205 = vld.sshfl [vmem:[#allocation1 + $0x8] sm:$0xff pattern:$0x75316420]
      %208 = vrot.lane.b32.xlu0 %v204, 17
      %v209 = vpop.permute.xlu0 %208
      %210 = vrot.lane.b32.xlu0 %v205, 17
      %v211 = vpop.permute.xlu0 %210
      %vm212 = vcmp.lt.s32.totalorder %v186, 17
      %v213 = vsel %vm212, %v209, %v211
      %v214 = vsel %vm212, %v211, %v209
      %vm215 = vmand %vm194, %vm198
      %vm216 = vmand %vm195, %vm199
      %v217 = vsel %vm215, %v214, 0.0
      %v218 = vsel %vm216, %v213, 0.0
      %v219 = vld [vmem:[%s1] sm:$0xf]
      %220 = vst [vmem:[#allocation1] ss:$2 sm:$0xff] %v182
      %v221 = vld.sshfl [vmem:[#allocation1] sm:$0xff pattern:$0x75316420]
      %v222 = vld.sshfl [vmem:[#allocation1 + $0x8] sm:$0xff pattern:$0x75316420]
      %225 = vrot.lane.b32.xlu0 %v221, 16
      %v226 = vpop.permute.xlu0 %225
      %227 = vrot.lane.b32.xlu0 %v222, 16
      %v228 = vpop.permute.xlu0 %227
      %vm229 = vcmp.lt.s32.totalorder %v186, 16
      %v230 = vsel %vm229, %v226, %v228
      %v231 = vsel %vm229, %v228, %v226
      %v232 = vsel %vm194, %v231, 0.0
      %v233 = vsel %vm195, %v230, 0.0
      %s234 = scalar_lea.vmem %s1, 4
      %v235 = vld [vmem:[%s234] sm:$0xf]
      %vm236 = vcmask 31744
      %v238 = vsel %vm236, %v235, 0
      %vm240 = vcmask 1043456
      %v242 = vsel %vm240, %v232, 0
      %v245 = vsel %vm240, %v233, 0
      %247 = vmatpush.msra.mxu0 0.0
      %248 = vmatpush.msra.mxu0 0.0
      %249 = vmatpush.msra.mxu0 0.0
      %250 = vmatpush.msra.mxu0 0.0
      %251 = vmatpush.msra.mxu0 0.0
      %252 = vmatpush.msra.mxu0 0.0
      %253 = vmatpush.msra.mxu0 0.0
      %254 = vmatpush.msra.mxu0 0.0
      %255 = vmatpush.msra.mxu0 0.0
      %256 = vmatpush.msra.mxu0 0.0
      %257 = vmatpush.msra.mxu0 0.0
      %258 = vmatpush.msra.mxu0 0.0
      %259 = vmatpush.msra.mxu0 0.0
      %260 = vmatpush.msra.mxu0 0.0
      %261 = vmatpush.msra.mxu0 0.0
      %262 = vmatpush.msra.mxu0 %v242
      %263 = vmatmul.f32.gmra.mxu0 %v238
      %v264 = vpop.f32.mrf.mxu0
      %v265 = vadd.f32 0.0, %v264
      %266 = vdwg.mxu0
      %267 = vmatpush.msra.mxu0 0.0
      %268 = vmatpush.msra.mxu0 0.0
      %269 = vmatpush.msra.mxu0 0.0
      %270 = vmatpush.msra.mxu0 0.0
      %271 = vmatpush.msra.mxu0 0.0
      %272 = vmatpush.msra.mxu0 0.0
      %273 = vmatpush.msra.mxu0 0.0
      %274 = vmatpush.msra.mxu0 0.0
      %275 = vmatpush.msra.mxu0 0.0
      %276 = vmatpush.msra.mxu0 0.0
      %277 = vmatpush.msra.mxu0 0.0
      %278 = vmatpush.msra.mxu0 0.0
      %279 = vmatpush.msra.mxu0 0.0
      %280 = vmatpush.msra.mxu0 0.0
      %281 = vmatpush.msra.mxu0 0.0
      %282 = vmatpush.msra.mxu0 %v245
      %283 = vmatmul.f32.gmra.mxu0 %v238
      %v284 = vpop.f32.mrf.mxu0
      %v285 = vadd.f32 0.0, %v284
      %286 = vdwg.mxu0
      %v288 = vsel %vm236, %v219, 0
      %v291 = vsel %vm240, %v217, 0
      %v294 = vsel %vm240, %v218, 0
      %296 = vmatpush.msra.mxu0 0.0
      %297 = vmatpush.msra.mxu0 0.0
      %298 = vmatpush.msra.mxu0 0.0
      %299 = vmatpush.msra.mxu0 0.0
      %300 = vmatpush.msra.mxu0 0.0
      %301 = vmatpush.msra.mxu0 0.0
      %302 = vmatpush.msra.mxu0 0.0
      %303 = vmatpush.msra.mxu0 0.0
      %304 = vmatpush.msra.mxu0 0.0
      %305 = vmatpush.msra.mxu0 0.0
      %306 = vmatpush.msra.mxu0 0.0
      %307 = vmatpush.msra.mxu0 0.0
      %308 = vmatpush.msra.mxu0 0.0
      %309 = vmatpush.msra.mxu0 0.0
      %310 = vmatpush.msra.mxu0 0.0
      %311 = vmatpush.msra.mxu0 %v291
      %312 = vmatmul.f32.gmra.mxu0 %v288
      %v313 = vpop.f32.mrf.mxu0
      %v314 = vadd.f32 %v265, %v313
      %315 = vdwg.mxu0
      %316 = vmatpush.msra.mxu0 0.0
      %317 = vmatpush.msra.mxu0 0.0
      %318 = vmatpush.msra.mxu0 0.0
      %319 = vmatpush.msra.mxu0 0.0
      %320 = vmatpush.msra.mxu0 0.0
      %321 = vmatpush.msra.mxu0 0.0
      %322 = vmatpush.msra.mxu0 0.0
      %323 = vmatpush.msra.mxu0 0.0
      %324 = vmatpush.msra.mxu0 0.0
      %325 = vmatpush.msra.mxu0 0.0
      %326 = vmatpush.msra.mxu0 0.0
      %327 = vmatpush.msra.mxu0 0.0
      %328 = vmatpush.msra.mxu0 0.0
      %329 = vmatpush.msra.mxu0 0.0
      %330 = vmatpush.msra.mxu0 0.0
      %331 = vmatpush.msra.mxu0 %v294
      %332 = vmatmul.f32.gmra.mxu0 %v288
      %v333 = vpop.f32.mrf.mxu0
      %v334 = vadd.f32 %v285, %v333
      %335 = vdwg.mxu0
      %336 = vst [vmem:[#allocation1] ss:$2 sm:$0xff] %v182
      %v337 = vld.sshfl [vmem:[#allocation1] sm:$0xff pattern:$0x75316420]
      %v338 = vld.sshfl [vmem:[#allocation1 + $0x8] sm:$0xff pattern:$0x75316420]
      %341 = vrot.lane.b32.xlu0 %v337, 15
      %v342 = vpop.permute.xlu0 %341
      %343 = vrot.lane.b32.xlu0 %v338, 15
      %v344 = vpop.permute.xlu0 %343
      %vm345 = vcmp.lt.s32.totalorder %v186, 15
      %v346 = vsel %vm345, %v342, %v344
      %v347 = vsel %vm345, %v344, %v342
      %vm348 = vmand %vm194, %vm200
      %vm349 = vmand %vm195, %vm201
      %v350 = vsel %vm348, %v347, 0.0
      %v351 = vsel %vm349, %v346, 0.0
      %s352 = scalar_lea.vmem %s1, 8
      %v353 = vld [vmem:[%s352] sm:$0xf]
      %v355 = vsel %vm236, %v353, 0
      %v358 = vsel %vm240, %v350, 0
      %v361 = vsel %vm240, %v351, 0
      %363 = vmatpush.msra.mxu0 0.0
      %364 = vmatpush.msra.mxu0 0.0
      %365 = vmatpush.msra.mxu0 0.0
      %366 = vmatpush.msra.mxu0 0.0
      %367 = vmatpush.msra.mxu0 0.0
      %368 = vmatpush.msra.mxu0 0.0
      %369 = vmatpush.msra.mxu0 0.0
      %370 = vmatpush.msra.mxu0 0.0
      %371 = vmatpush.msra.mxu0 0.0
      %372 = vmatpush.msra.mxu0 0.0
      %373 = vmatpush.msra.mxu0 0.0
      %374 = vmatpush.msra.mxu0 0.0
      %375 = vmatpush.msra.mxu0 0.0
      %376 = vmatpush.msra.mxu0 0.0
      %377 = vmatpush.msra.mxu0 0.0
      %378 = vmatpush.msra.mxu0 %v358
      %379 = vmatmul.f32.gmra.mxu0 %v355
      %v380 = vpop.f32.mrf.mxu0
      %v381 = vadd.f32 0.0, %v380
      %382 = vdwg.mxu0
      %383 = vmatpush.msra.mxu0 0.0
      %384 = vmatpush.msra.mxu0 0.0
      %385 = vmatpush.msra.mxu0 0.0
      %386 = vmatpush.msra.mxu0 0.0
      %387 = vmatpush.msra.mxu0 0.0
      %388 = vmatpush.msra.mxu0 0.0
      %389 = vmatpush.msra.mxu0 0.0
      %390 = vmatpush.msra.mxu0 0.0
      %391 = vmatpush.msra.mxu0 0.0
      %392 = vmatpush.msra.mxu0 0.0
      %393 = vmatpush.msra.mxu0 0.0
      %394 = vmatpush.msra.mxu0 0.0
      %395 = vmatpush.msra.mxu0 0.0
      %396 = vmatpush.msra.mxu0 0.0
      %397 = vmatpush.msra.mxu0 0.0
      %398 = vmatpush.msra.mxu0 %v361
      %399 = vmatmul.f32.gmra.mxu0 %v355
      %v400 = vpop.f32.mrf.mxu0
      %v401 = vadd.f32 0.0, %v400
      %402 = vdwg.mxu0
      %v403 = vadd.f32 %v314, %v381
      %v404 = vadd.f32 %v334, %v401
      %405 = vst [vmem:[#allocation1] ss:$2 sm:$0xff] %v182
      %v406 = vld.sshfl [vmem:[#allocation1] sm:$0xff pattern:$0x75316420]
      %v407 = vld.sshfl [vmem:[#allocation1 + $0x8] sm:$0xff pattern:$0x75316420]
      %410 = vrot.lane.b32.xlu0 %v406, 1
      %v411 = vpop.permute.xlu0 %410
      %412 = vrot.lane.b32.xlu0 %v407, 1
      %v413 = vpop.permute.xlu0 %412
      %vm414 = vcmp.lt.s32.totalorder %v186, 1
      %v415 = vsel %vm414, %v411, %v413
      %v416 = vsel %vm414, %v413, %v411
      %v417 = vsel %vm198, %v416, 0.0
      %v418 = vsel %vm199, %v415, 0.0
      %s419 = scalar_lea.vmem %s1, 12
      %v420 = vld [vmem:[%s419] sm:$0xf]
      %v422 = vsel %vm236, %v420, 0
      %v425 = vsel %vm240, %v417, 0
      %v428 = vsel %vm240, %v418, 0
      %430 = vmatpush.msra.mxu0 0.0
      %431 = vmatpush.msra.mxu0 0.0
      %432 = vmatpush.msra.mxu0 0.0
      %433 = vmatpush.msra.mxu0 0.0
      %434 = vmatpush.msra.mxu0 0.0
      %435 = vmatpush.msra.mxu0 0.0
      %436 = vmatpush.msra.mxu0 0.0
      %437 = vmatpush.msra.mxu0 0.0
      %438 = vmatpush.msra.mxu0 0.0
      %439 = vmatpush.msra.mxu0 0.0
      %440 = vmatpush.msra.mxu0 0.0
      %441 = vmatpush.msra.mxu0 0.0
      %442 = vmatpush.msra.mxu0 0.0
      %443 = vmatpush.msra.mxu0 0.0
      %444 = vmatpush.msra.mxu0 0.0
      %445 = vmatpush.msra.mxu0 %v425
      %446 = vmatmul.f32.gmra.mxu0 %v422
      %v447 = vpop.f32.mrf.mxu0
      %v448 = vadd.f32 0.0, %v447
      %449 = vdwg.mxu0
      %450 = vmatpush.msra.mxu0 0.0
      %451 = vmatpush.msra.mxu0 0.0
      %452 = vmatpush.msra.mxu0 0.0
      %453 = vmatpush.msra.mxu0 0.0
      %454 = vmatpush.msra.mxu0 0.0
      %455 = vmatpush.msra.mxu0 0.0
      %456 = vmatpush.msra.mxu0 0.0
      %457 = vmatpush.msra.mxu0 0.0
      %458 = vmatpush.msra.mxu0 0.0
      %459 = vmatpush.msra.mxu0 0.0
      %460 = vmatpush.msra.mxu0 0.0
      %461 = vmatpush.msra.mxu0 0.0
      %462 = vmatpush.msra.mxu0 0.0
      %463 = vmatpush.msra.mxu0 0.0
      %464 = vmatpush.msra.mxu0 0.0
      %465 = vmatpush.msra.mxu0 %v428
      %466 = vmatmul.f32.gmra.mxu0 %v422
      %v467 = vpop.f32.mrf.mxu0
      %v468 = vadd.f32 0.0, %v467
      %469 = vdwg.mxu0
      %v470 = vadd.f32 %v403, %v448
      %v471 = vadd.f32 %v404, %v468
      %s472 = scalar_lea.vmem %s1, 16
      %v473 = vld [vmem:[%s472] sm:$0xf]
      %474 = vst [vmem:[#allocation1] ss:$2 sm:$0xff] %v182
      %v475 = vld.sshfl [vmem:[#allocation1] sm:$0xff pattern:$0x75316420]
      %v476 = vld.sshfl [vmem:[#allocation1 + $0x8] sm:$0xff pattern:$0x75316420]
      %v478 = vsel %vm236, %v473, 0
      %v480 = vsel %vm240, %v475, 0
      %v482 = vsel %vm240, %v476, 0
      %484 = vmatpush.msra.mxu0 0.0
      %485 = vmatpush.msra.mxu0 0.0
      %486 = vmatpush.msra.mxu0 0.0
      %487 = vmatpush.msra.mxu0 0.0
      %488 = vmatpush.msra.mxu0 0.0
      %489 = vmatpush.msra.mxu0 0.0
      %490 = vmatpush.msra.mxu0 0.0
      %491 = vmatpush.msra.mxu0 0.0
      %492 = vmatpush.msra.mxu0 0.0
      %493 = vmatpush.msra.mxu0 0.0
      %494 = vmatpush.msra.mxu0 0.0
      %495 = vmatpush.msra.mxu0 0.0
      %496 = vmatpush.msra.mxu0 0.0
      %497 = vmatpush.msra.mxu0 0.0
      %498 = vmatpush.msra.mxu0 0.0
      %499 = vmatpush.msra.mxu0 %v480
      %500 = vmatmul.f32.gmra.mxu0 %v478
      %v501 = vpop.f32.mrf.mxu0
      %v502 = vadd.f32 0.0, %v501
      %503 = vdwg.mxu0
      %504 = vmatpush.msra.mxu0 0.0
      %505 = vmatpush.msra.mxu0 0.0
      %506 = vmatpush.msra.mxu0 0.0
      %507 = vmatpush.msra.mxu0 0.0
      %508 = vmatpush.msra.mxu0 0.0
      %509 = vmatpush.msra.mxu0 0.0
      %510 = vmatpush.msra.mxu0 0.0
      %511 = vmatpush.msra.mxu0 0.0
      %512 = vmatpush.msra.mxu0 0.0
      %513 = vmatpush.msra.mxu0 0.0
      %514 = vmatpush.msra.mxu0 0.0
      %515 = vmatpush.msra.mxu0 0.0
      %516 = vmatpush.msra.mxu0 0.0
      %517 = vmatpush.msra.mxu0 0.0
      %518 = vmatpush.msra.mxu0 0.0
      %519 = vmatpush.msra.mxu0 %v482
      %520 = vmatmul.f32.gmra.mxu0 %v478
      %v521 = vpop.f32.mrf.mxu0
      %v522 = vadd.f32 0.0, %v521
      %523 = vdwg.mxu0
      %v524 = vadd.f32 %v470, %v502
      %v525 = vadd.f32 %v471, %v522
      %526 = vst [vmem:[#allocation1] ss:$2 sm:$0xff] %v182
      %v527 = vld.sshfl [vmem:[#allocation1] sm:$0xff pattern:$0x75316420]
      %v528 = vld.sshfl [vmem:[#allocation1 + $0x8] sm:$0xff pattern:$0x75316420]
      %531 = vrot.lane.b32.xlu0 %v527, 127
      %v532 = vpop.permute.xlu0 %531
      %533 = vrot.lane.b32.xlu0 %v528, 127
      %v534 = vpop.permute.xlu0 %533
      %vm535 = vcmp.lt.s32.totalorder %v186, 127
      %v536 = vsel %vm535, %v532, %v534
      %v537 = vsel %vm535, %v534, %v532
      %v538 = vsel %vm200, %v536, 0.0
      %v539 = vsel %vm201, %v537, 0.0
      %s540 = scalar_lea.vmem %s1, 20
      %v541 = vld [vmem:[%s540] sm:$0xf]
      %v543 = vsel %vm236, %v541, 0
      %v546 = vsel %vm240, %v538, 0
      %v549 = vsel %vm240, %v539, 0
      %551 = vmatpush.msra.mxu0 0.0
      %552 = vmatpush.msra.mxu0 0.0
      %553 = vmatpush.msra.mxu0 0.0
      %554 = vmatpush.msra.mxu0 0.0
      %555 = vmatpush.msra.mxu0 0.0
      %556 = vmatpush.msra.mxu0 0.0
      %557 = vmatpush.msra.mxu0 0.0
      %558 = vmatpush.msra.mxu0 0.0
      %559 = vmatpush.msra.mxu0 0.0
      %560 = vmatpush.msra.mxu0 0.0
      %561 = vmatpush.msra.mxu0 0.0
      %562 = vmatpush.msra.mxu0 0.0
      %563 = vmatpush.msra.mxu0 0.0
      %564 = vmatpush.msra.mxu0 0.0
      %565 = vmatpush.msra.mxu0 0.0
      %566 = vmatpush.msra.mxu0 %v546
      %567 = vmatmul.f32.gmra.mxu0 %v543
      %v568 = vpop.f32.mrf.mxu0
      %v569 = vadd.f32 0.0, %v568
      %570 = vdwg.mxu0
      %571 = vmatpush.msra.mxu0 0.0
      %572 = vmatpush.msra.mxu0 0.0
      %573 = vmatpush.msra.mxu0 0.0
      %574 = vmatpush.msra.mxu0 0.0
      %575 = vmatpush.msra.mxu0 0.0
      %576 = vmatpush.msra.mxu0 0.0
      %577 = vmatpush.msra.mxu0 0.0
      %578 = vmatpush.msra.mxu0 0.0
      %579 = vmatpush.msra.mxu0 0.0
      %580 = vmatpush.msra.mxu0 0.0
      %581 = vmatpush.msra.mxu0 0.0
      %582 = vmatpush.msra.mxu0 0.0
      %583 = vmatpush.msra.mxu0 0.0
      %584 = vmatpush.msra.mxu0 0.0
      %585 = vmatpush.msra.mxu0 0.0
      %586 = vmatpush.msra.mxu0 %v549
      %587 = vmatmul.f32.gmra.mxu0 %v543
      %v588 = vpop.f32.mrf.mxu0
      %v589 = vadd.f32 0.0, %v588
      %590 = vdwg.mxu0
      %v591 = vadd.f32 %v524, %v569
      %v592 = vadd.f32 %v525, %v589
      %593 = vst [vmem:[#allocation1] ss:$2 sm:$0xff] %v182
      %v594 = vld.sshfl [vmem:[#allocation1] sm:$0xff pattern:$0x75316420]
      %v595 = vld.sshfl [vmem:[#allocation1 + $0x8] sm:$0xff pattern:$0x75316420]
      %598 = vrot.lane.b32.xlu0 %v594, 113
      %v599 = vpop.permute.xlu0 %598
      %600 = vrot.lane.b32.xlu0 %v595, 113
      %v601 = vpop.permute.xlu0 %600
      %vm602 = vcmp.lt.s32.totalorder %v186, 113
      %v603 = vsel %vm602, %v599, %v601
      %v604 = vsel %vm602, %v601, %v599
      %vm605 = vmand %vm196, %vm198
      %vm606 = vmand %vm197, %vm199
      %v607 = vsel %vm605, %v603, 0.0
      %v608 = vsel %vm606, %v604, 0.0
      %s609 = scalar_lea.vmem %s1, 24
      %v610 = vld [vmem:[%s609] sm:$0xf]
      %v612 = vsel %vm236, %v610, 0
      %v615 = vsel %vm240, %v607, 0
      %v618 = vsel %vm240, %v608, 0
      %620 = vmatpush.msra.mxu0 0.0
      %621 = vmatpush.msra.mxu0 0.0
      %622 = vmatpush.msra.mxu0 0.0
      %623 = vmatpush.msra.mxu0 0.0
      %624 = vmatpush.msra.mxu0 0.0
      %625 = vmatpush.msra.mxu0 0.0
      %626 = vmatpush.msra.mxu0 0.0
      %627 = vmatpush.msra.mxu0 0.0
      %628 = vmatpush.msra.mxu0 0.0
      %629 = vmatpush.msra.mxu0 0.0
      %630 = vmatpush.msra.mxu0 0.0
      %631 = vmatpush.msra.mxu0 0.0
      %632 = vmatpush.msra.mxu0 0.0
      %633 = vmatpush.msra.mxu0 0.0
      %634 = vmatpush.msra.mxu0 0.0
      %635 = vmatpush.msra.mxu0 %v615
      %636 = vmatmul.f32.gmra.mxu0 %v612
      %v637 = vpop.f32.mrf.mxu0
      %v638 = vadd.f32 0.0, %v637
      %639 = vdwg.mxu0
      %640 = vmatpush.msra.mxu0 0.0
      %641 = vmatpush.msra.mxu0 0.0
      %642 = vmatpush.msra.mxu0 0.0
      %643 = vmatpush.msra.mxu0 0.0
      %644 = vmatpush.msra.mxu0 0.0
      %645 = vmatpush.msra.mxu0 0.0
      %646 = vmatpush.msra.mxu0 0.0
      %647 = vmatpush.msra.mxu0 0.0
      %648 = vmatpush.msra.mxu0 0.0
      %649 = vmatpush.msra.mxu0 0.0
      %650 = vmatpush.msra.mxu0 0.0
      %651 = vmatpush.msra.mxu0 0.0
      %652 = vmatpush.msra.mxu0 0.0
      %653 = vmatpush.msra.mxu0 0.0
      %654 = vmatpush.msra.mxu0 0.0
      %655 = vmatpush.msra.mxu0 %v618
      %656 = vmatmul.f32.gmra.mxu0 %v612
      %v657 = vpop.f32.mrf.mxu0
      %v658 = vadd.f32 0.0, %v657
      %659 = vdwg.mxu0
      %v660 = vadd.f32 %v591, %v638
      %v661 = vadd.f32 %v592, %v658
      %662 = vst [vmem:[#allocation1] ss:$2 sm:$0xff] %v182
      %v663 = vld.sshfl [vmem:[#allocation1] sm:$0xff pattern:$0x75316420]
      %v664 = vld.sshfl [vmem:[#allocation1 + $0x8] sm:$0xff pattern:$0x75316420]
      %667 = vrot.lane.b32.xlu0 %v663, 112
      %v668 = vpop.permute.xlu0 %667
      %669 = vrot.lane.b32.xlu0 %v664, 112
      %v670 = vpop.permute.xlu0 %669
      %vm671 = vcmp.lt.s32.totalorder %v186, 112
      %v672 = vsel %vm671, %v668, %v670
      %v673 = vsel %vm671, %v670, %v668
      %v674 = vsel %vm196, %v672, 0.0
      %v675 = vsel %vm197, %v673, 0.0
      %s676 = scalar_lea.vmem %s1, 28
      %v677 = vld [vmem:[%s676] sm:$0xf]
      %v679 = vsel %vm236, %v677, 0
      %v682 = vsel %vm240, %v674, 0
      %v685 = vsel %vm240, %v675, 0
      %687 = vmatpush.msra.mxu0 0.0
      %688 = vmatpush.msra.mxu0 0.0
      %689 = vmatpush.msra.mxu0 0.0
      %690 = vmatpush.msra.mxu0 0.0
      %691 = vmatpush.msra.mxu0 0.0
      %692 = vmatpush.msra.mxu0 0.0
      %693 = vmatpush.msra.mxu0 0.0
      %694 = vmatpush.msra.mxu0 0.0
      %695 = vmatpush.msra.mxu0 0.0
      %696 = vmatpush.msra.mxu0 0.0
      %697 = vmatpush.msra.mxu0 0.0
      %698 = vmatpush.msra.mxu0 0.0
      %699 = vmatpush.msra.mxu0 0.0
      %700 = vmatpush.msra.mxu0 0.0
      %701 = vmatpush.msra.mxu0 0.0
      %702 = vmatpush.msra.mxu0 %v682
      %703 = vmatmul.f32.gmra.mxu0 %v679
      %v704 = vpop.f32.mrf.mxu0
      %v705 = vadd.f32 0.0, %v704
      %706 = vdwg.mxu0
      %707 = vmatpush.msra.mxu0 0.0
      %708 = vmatpush.msra.mxu0 0.0
      %709 = vmatpush.msra.mxu0 0.0
      %710 = vmatpush.msra.mxu0 0.0
      %711 = vmatpush.msra.mxu0 0.0
      %712 = vmatpush.msra.mxu0 0.0
      %713 = vmatpush.msra.mxu0 0.0
      %714 = vmatpush.msra.mxu0 0.0
      %715 = vmatpush.msra.mxu0 0.0
      %716 = vmatpush.msra.mxu0 0.0
      %717 = vmatpush.msra.mxu0 0.0
      %718 = vmatpush.msra.mxu0 0.0
      %719 = vmatpush.msra.mxu0 0.0
      %720 = vmatpush.msra.mxu0 0.0
      %721 = vmatpush.msra.mxu0 0.0
      %722 = vmatpush.msra.mxu0 %v685
      %723 = vmatmul.f32.gmra.mxu0 %v679
      %v724 = vpop.f32.mrf.mxu0
      %v725 = vadd.f32 0.0, %v724
      %726 = vdwg.mxu0
      %v727 = vadd.f32 %v660, %v705
      %v728 = vadd.f32 %v661, %v725
      %729 = vst [vmem:[#allocation1] ss:$2 sm:$0xff] %v182
      %v730 = vld.sshfl [vmem:[#allocation1] sm:$0xff pattern:$0x75316420]
      %v731 = vld.sshfl [vmem:[#allocation1 + $0x8] sm:$0xff pattern:$0x75316420]
      %734 = vrot.lane.b32.xlu0 %v730, 111
      %v735 = vpop.permute.xlu0 %734
      %736 = vrot.lane.b32.xlu0 %v731, 111
      %v737 = vpop.permute.xlu0 %736
      %vm738 = vcmp.lt.s32.totalorder %v186, 111
      %v739 = vsel %vm738, %v735, %v737
      %v740 = vsel %vm738, %v737, %v735
      %vm741 = vmand %vm196, %vm200
      %vm742 = vmand %vm197, %vm201
      %v743 = vsel %vm741, %v739, 0.0
      %v744 = vsel %vm742, %v740, 0.0
      %s745 = scalar_lea.vmem %s1, 32
      %v746 = vld [vmem:[%s745] sm:$0xf]
      %v748 = vsel %vm236, %v746, 0
      %v751 = vsel %vm240, %v743, 0
      %v754 = vsel %vm240, %v744, 0
      %756 = vmatpush.msra.mxu0 0.0
      %757 = vmatpush.msra.mxu0 0.0
      %758 = vmatpush.msra.mxu0 0.0
      %759 = vmatpush.msra.mxu0 0.0
      %760 = vmatpush.msra.mxu0 0.0
      %761 = vmatpush.msra.mxu0 0.0
      %762 = vmatpush.msra.mxu0 0.0
      %763 = vmatpush.msra.mxu0 0.0
      %764 = vmatpush.msra.mxu0 0.0
      %765 = vmatpush.msra.mxu0 0.0
      %766 = vmatpush.msra.mxu0 0.0
      %767 = vmatpush.msra.mxu0 0.0
      %768 = vmatpush.msra.mxu0 0.0
      %769 = vmatpush.msra.mxu0 0.0
      %770 = vmatpush.msra.mxu0 0.0
      %771 = vmatpush.msra.mxu0 %v751
      %772 = vmatmul.f32.gmra.mxu0 %v748
      %v773 = vpop.f32.mrf.mxu0
      %v774 = vadd.f32 0.0, %v773
      %775 = vdwg.mxu0
      %776 = vmatpush.msra.mxu0 0.0
      %777 = vmatpush.msra.mxu0 0.0
      %778 = vmatpush.msra.mxu0 0.0
      %779 = vmatpush.msra.mxu0 0.0
      %780 = vmatpush.msra.mxu0 0.0
      %781 = vmatpush.msra.mxu0 0.0
      %782 = vmatpush.msra.mxu0 0.0
      %783 = vmatpush.msra.mxu0 0.0
      %784 = vmatpush.msra.mxu0 0.0
      %785 = vmatpush.msra.mxu0 0.0
      %786 = vmatpush.msra.mxu0 0.0
      %787 = vmatpush.msra.mxu0 0.0
      %788 = vmatpush.msra.mxu0 0.0
      %789 = vmatpush.msra.mxu0 0.0
      %790 = vmatpush.msra.mxu0 0.0
      %791 = vmatpush.msra.mxu0 %v754
      %792 = vmatmul.f32.gmra.mxu0 %v748
      %v793 = vpop.f32.mrf.mxu0
      %v794 = vadd.f32 0.0, %v793
      %795 = vdwg.mxu0
      %v796 = vadd.f32 %v727, %v774
      %v797 = vadd.f32 %v728, %v794
      %s798 = scalar_lea.vmem %s1, 44
      %v799 = vld [vmem:[%s798] sm:$0xf]
      %801 = vset.pattern.permute.xlu0 0
      %802 = vperm.xlu0 %801, %v799
      %v803 = vpop.permute.xlu0 %802
      %v805 = vadd.f32 %v796, %v803
      %v806 = vadd.f32 %v797, %v803
      %v807 = vmax.f32 %v805, 0.0
      %v808 = vmax.f32 %v806, 0.0
      %s809 = scalar_lea.vmem %s1, 36
      %v810 = vld [vmem:[%s809] sm:$0xf]
      %811 = vset.pattern.permute.xlu0 1
      %812 = vperm.xlu0 %811, %v799
      %v813 = vpop.permute.xlu0 %812
      %v816 = vsel %vm236, %v810, 0
      %v819 = vsel %vm240, %v807, 0
      %v822 = vsel %vm240, %v808, 0
      %824 = vmatpush.msra.mxu0 0.0
      %825 = vmatpush.msra.mxu0 0.0
      %826 = vmatpush.msra.mxu0 0.0
      %827 = vmatpush.msra.mxu0 0.0
      %828 = vmatpush.msra.mxu0 0.0
      %829 = vmatpush.msra.mxu0 0.0
      %830 = vmatpush.msra.mxu0 0.0
      %831 = vmatpush.msra.mxu0 0.0
      %832 = vmatpush.msra.mxu0 0.0
      %833 = vmatpush.msra.mxu0 0.0
      %834 = vmatpush.msra.mxu0 0.0
      %835 = vmatpush.msra.mxu0 0.0
      %836 = vmatpush.msra.mxu0 0.0
      %837 = vmatpush.msra.mxu0 0.0
      %838 = vmatpush.msra.mxu0 0.0
      %839 = vmatpush.msra.mxu0 %v819
      %840 = vmatmul.f32.gmra.mxu0 %v816
      %v841 = vpop.f32.mrf.mxu0
      %v842 = vadd.f32 %v813, %v841
      %843 = vdwg.mxu0
      %844 = vmatpush.msra.mxu0 0.0
      %845 = vmatpush.msra.mxu0 0.0
      %846 = vmatpush.msra.mxu0 0.0
      %847 = vmatpush.msra.mxu0 0.0
      %848 = vmatpush.msra.mxu0 0.0
      %849 = vmatpush.msra.mxu0 0.0
      %850 = vmatpush.msra.mxu0 0.0
      %851 = vmatpush.msra.mxu0 0.0
      %852 = vmatpush.msra.mxu0 0.0
      %853 = vmatpush.msra.mxu0 0.0
      %854 = vmatpush.msra.mxu0 0.0
      %855 = vmatpush.msra.mxu0 0.0
      %856 = vmatpush.msra.mxu0 0.0
      %857 = vmatpush.msra.mxu0 0.0
      %858 = vmatpush.msra.mxu0 0.0
      %859 = vmatpush.msra.mxu0 %v822
      %860 = vmatmul.f32.gmra.mxu0 %v816
      %v861 = vpop.f32.mrf.mxu0
      %v862 = vadd.f32 %v813, %v861
      %863 = vdwg.mxu0
      %s864 = scalar_lea.vmem %s1, 40
      %v865 = vld [vmem:[%s864] sm:$0xf]
      %866 = vset.pattern.permute.xlu0 2
      %867 = vperm.xlu0 %866, %v799
      %v868 = vpop.permute.xlu0 %867
      %v871 = vsel %vm236, %v865, 0
      %873 = vmatpush.msra.mxu0 0.0
      %874 = vmatpush.msra.mxu0 0.0
      %875 = vmatpush.msra.mxu0 0.0
      %876 = vmatpush.msra.mxu0 0.0
      %877 = vmatpush.msra.mxu0 0.0
      %878 = vmatpush.msra.mxu0 0.0
      %879 = vmatpush.msra.mxu0 0.0
      %880 = vmatpush.msra.mxu0 0.0
      %881 = vmatpush.msra.mxu0 0.0
      %882 = vmatpush.msra.mxu0 0.0
      %883 = vmatpush.msra.mxu0 0.0
      %884 = vmatpush.msra.mxu0 0.0
      %885 = vmatpush.msra.mxu0 0.0
      %886 = vmatpush.msra.mxu0 0.0
      %887 = vmatpush.msra.mxu0 0.0
      %888 = vmatpush.msra.mxu0 %v819
      %889 = vmatmul.f32.gmra.mxu0 %v871
      %v890 = vpop.f32.mrf.mxu0
      %v891 = vadd.f32 %v868, %v890
      %892 = vdwg.mxu0
      %893 = vmatpush.msra.mxu0 0.0
      %894 = vmatpush.msra.mxu0 0.0
      %895 = vmatpush.msra.mxu0 0.0
      %896 = vmatpush.msra.mxu0 0.0
      %897 = vmatpush.msra.mxu0 0.0
      %898 = vmatpush.msra.mxu0 0.0
      %899 = vmatpush.msra.mxu0 0.0
      %900 = vmatpush.msra.mxu0 0.0
      %901 = vmatpush.msra.mxu0 0.0
      %902 = vmatpush.msra.mxu0 0.0
      %903 = vmatpush.msra.mxu0 0.0
      %904 = vmatpush.msra.mxu0 0.0
      %905 = vmatpush.msra.mxu0 0.0
      %906 = vmatpush.msra.mxu0 0.0
      %907 = vmatpush.msra.mxu0 0.0
      %908 = vmatpush.msra.mxu0 %v822
      %909 = vmatmul.f32.gmra.mxu0 %v871
      %v910 = vpop.f32.mrf.mxu0
      %v911 = vadd.f32 %v868, %v910
      %912 = vdwg.mxu0
      %v913 = vtanh.pop %v891
      %v914 = vtanh.pop %v911
      %v915 = vmul.f32 %v913, 1.4
      %v916 = vmul.f32 %v914, 1.4
      %v917 = vmul.f32 %v915, 1.442695
      %v918 = vpow.pop %v917
      %v919 = vmul.f32 %v916, 1.442695
      %v920 = vpow.pop %v919
      %v923 = vrot.slane %v920, 4
      %v924 = vsel %vm240, %v918, %v923
      %v926 = vmul.f32 %v184, %v924
      %928 = vst [vmem:[#allocation1] ss:$2 sm:$0xff] %v926
      %v929 = vld.sshfl [vmem:[#allocation1] sm:$0xff pattern:$0x75316420]
      %v930 = vld.sshfl [vmem:[#allocation1 + $0x8] sm:$0xff pattern:$0x75316420]
      %v933 = vadd.f32 %v842, %v929
      %v934 = vadd.f32 %v862, %v930
      %v937 = vrot.slane %v934, 4
      %v938 = vsel %vm240, %v933, %v937
      %940 = vst [vmem:[%s178] sm:$0xff] %v938
      %v941 = vsel %vm240, %v915, 0.0
      %v942 = vsel %vm240, %v916, 0.0
      %v943 = vadd.f32 %v941, %v942
      %944 = vadd.xlane.f32.xlu0 %v943
      %v945 = vpop.xlane.xlu0 %944
      %v946 = vrot.slane %v945, 4
      %v947 = vadd.f32 %v945, %v946
      %v948 = vrot.slane %v947, 2
      %v949 = vadd.f32 %v947, %v948
      %v950 = vrot.slane %v949, 1
      %v951 = vadd.f32 %v949, %v950
      %s952 = vtos %v951
      %s953 = smul.f32 %s952, 0.25
      %v954 = vstv %s953
      %vm955 = vcmask 0
      %956 = vst.msk [vmem:[%s181] sm:$0x1] %vm955, %v954
      %p957 = scmp.lt.s32.totalorder %s15, 1
      %s958 = scalar_select %p957, %s15, 1
      %s959 = smul.addr %s958, 4
      %s960 = sadd.s32 2, %s959
      %s961 = smul.addr %s960, 4
      %s962 = scalar_lea.vmem %s2, %s961
      %p963 = scmp.lt.s32.totalorder %s15, 1
      %s964 = scalar_select %p963, %s15, 1
      %s965 = scalar_lea.vmem %s3, %s964
      // Predicated region
      $region29: #{fwd.1} parent=27 // pred_check
        %p966 = pneg %p80
      $region30: #{fwd.1} parent=27 // pred_check_branch
        %968 = sbr.rel (%p966) target = $region32
      $region31: #{fwd.1} parent=27 // pred_region
        _
      $region32: #{fwd.1} parent=27 // pred_fallthru
        _
      // Predicated region
      $region33: #{fwd.1} parent=27 // pred_check
        %p969 = pneg %p106
      $region34: #{fwd.1} parent=27 // pred_check_branch
        %971 = sbr.rel (%p969) target = $region36
      $region35: #{fwd.1} parent=27 // pred_region
        _
      $region36: #{fwd.1} parent=27 // pred_fallthru
        _
    $region28: #{fwd.1} parent=5 // pred_fallthru
      _
    %p972 = scmp.le.s32.totalorder 2, %s10
    // Predicated region
    $region37: #{fwd.1} parent=5 // pred_check
      %p973 = pneg %p972
    $region38: #{fwd.1} parent=5 // pred_check_branch
      %975 = sbr.rel (%p973) target = $region40
    $region39: #{fwd.1} parent=5 // pred_region
      %s976 = ssub.s32 %s10, 2
      // Predicated region
      $region41: #{fwd.1} parent=39 // pred_check
        %p977 = pneg %p86
      $region42: #{fwd.1} parent=39 // pred_check_branch
        %979 = sbr.rel (%p977) target = $region44
      $region43: #{fwd.1} parent=39 // pred_region
        %p980 = scmp.lt.s32.totalorder %s16, 1
        %s981 = scalar_select %p980, %s16, 1
        %s982 = smul.addr %s981, 4
        %s983 = sadd.s32 2, %s982
        %s984 = smul.addr %s983, 4
        %s985 = scalar_lea.vmem %s2, %s984
      $region44: #{fwd.1} parent=39 // pred_fallthru
        _
      // Predicated region
      $region45: #{fwd.1} parent=39 // pred_check
        %p986 = pneg %p112
      $region46: #{fwd.1} parent=39 // pred_check_branch
        %988 = sbr.rel (%p986) target = $region48
      $region47: #{fwd.1} parent=39 // pred_region
        %p989 = scmp.lt.s32.totalorder %s16, 1
        %s990 = scalar_select %p989, %s16, 1
        %s991 = scalar_lea.vmem %s3, %s990
      $region48: #{fwd.1} parent=39 // pred_fallthru
        _
    $region40: #{fwd.1} parent=5 // pred_fallthru
      _
  $region6: #{fwd.1} parent=0 // loop_footer
    %s14 = sadd.s32 1, %s10
  $region7: #{fwd.1} parent=0 // loop_footer_branch
    %9 = sbr.rel target = $region3
  $region8: #{fwd.1} parent=0 // loop_exit
    _

</llo_original>
